<compile_context>
chip_gen: v7x
topology: tpu7x:2x2x1
jax: 0.10.0
libtpu: 0.0.40
codegen_flags: <defaults>
</compile_context>

<pallas_src>
import functools

import jax
import jax.numpy as jnp
from jax.experimental import pallas as pl
from jax.experimental.pallas import tpu as pltpu


def _round_up(x, m):
    return ((x + m - 1) // m) * m


# ---------------------------------------------------------------------------
# Fused MLP kernel: layer 0 .. layer L-1, leaky_relu between hidden layers.
# ---------------------------------------------------------------------------
def _mlp_kernel(n_layers, x_ref, *refs):
    # refs = [W0, b0, W1, b1, ..., W_{L-1}, b_{L-1}, out_ref]
    wb_refs = refs[:2 * n_layers]
    out_ref = refs[2 * n_layers]

    h = x_ref[...]                                   # (tb, inp_dim) bf16
    for i in range(n_layers):
        w_ref = wb_refs[2 * i]
        b_ref = wb_refs[2 * i + 1]
        h = jnp.dot(h.astype(w_ref.dtype), w_ref[...],
                    preferred_element_type=jnp.float32) + b_ref[...]
        if i < n_layers - 1:
            # F.leaky_relu default negative_slope = 0.01; dropout == identity.
            h = jnp.maximum(h, 0.01 * h)
    out_ref[...] = h.astype(out_ref.dtype)


# ---------------------------------------------------------------------------
# pallas_call wrapper
# ---------------------------------------------------------------------------
def fused_mlp_forward(x, wb, *, tb):
    """x:  (B_pad, inp_dim) bf16, B_pad a multiple of tb.
    wb: flat [W0, b0, ..., W_last_pad, b_last_pad]; W bf16, b f32 (1, dout).
    Last layer already lane-padded to a multiple of 128 columns."""
    B_pad, inp_dim = x.shape
    n_layers = len(wb) // 2
    out_pad = wb[-2].shape[-1]
    nb = B_pad // tb

    in_specs = [pl.BlockSpec((tb, inp_dim), lambda i: (i, 0))]
    for a in wb:
        # Constant block index -> resident in VMEM, not re-fetched per step.
        in_specs.append(pl.BlockSpec(a.shape, lambda i: (0, 0)))
    out_specs = pl.BlockSpec((tb, out_pad), lambda i: (i, 0))

    # Advisory cost for the XLA scheduler.
    flops = 0
    for j in range(0, len(wb), 2):
        flops += 2 * B_pad * wb[j].shape[0] * wb[j].shape[1]
    bytes_accessed = int(x.size * x.dtype.itemsize
                         + sum(a.size * a.dtype.itemsize for a in wb)
                         + B_pad * out_pad * 4)

    kernel = functools.partial(_mlp_kernel, n_layers)
    return pl.pallas_call(
        kernel,
        out_shape=jax.ShapeDtypeStruct((B_pad, out_pad), jnp.float32),
        grid=(nb,),
        in_specs=in_specs,
        out_specs=out_specs,
        compiler_params=pltpu.CompilerParams(
            dimension_semantics=("parallel",)),       # batch tiles; 2nd TC on v7x
        cost_estimate=pl.CostEstimate(flops=flops, transcendentals=0,
                                      bytes_accessed=bytes_accessed),
    )(x, *wb)


# ---------------------------------------------------------------------------
# NN module (parameter construction + forward glue)
# ---------------------------------------------------------------------------
class NNPallas:
    """JAX/Pallas port of GANBandit `NN` (inference forward pass)."""

    N_ITEMS = 9724 + 1
    N_USERS = 610 + 1

    def __init__(self, inp_dim, out_dim, hidden, layers, drop, emb_dim=0, seed=0):
        del drop                       # inference: dropout is identity
        assert layers >= 2, "need at least one hidden + one output layer"
        self.layers = layers
        self.emb_dim = emb_dim
        self.out_dim = out_dim
        self.hidden = hidden
        out_pad = _round_up(out_dim, 128)

        key = jax.random.PRNGKey(seed)
        keys = jax.random.split(key, 2 * layers + 2)

        # Linear layer sizes exactly as in the torch module.
        dims_in = [inp_dim] + [hidden] * (layers - 1)
        dims_out = [hidden] * (layers - 1) + [out_dim]

        def linear(kw, kb, din, dout):
            bound = 1.0 / float(din) ** 0.5
            w = jax.random.uniform(kw, (din, dout), jnp.float32, -bound, bound)
            b = jax.random.uniform(kb, (1, dout), jnp.float32, -bound, bound)
            return w, b

        wb = []
        for i in range(layers):
            w, b = linear(keys[2 * i], keys[2 * i + 1], dims_in[i], dims_out[i])
            if i == layers - 1:
                # Lane-pad the last layer to 128-column multiples (zero columns
                # sliced off outside) so the final matmul/store is lane-dense.
                w = jnp.pad(w, ((0, 0), (0, out_pad - out_dim)))
                b = jnp.pad(b, ((0, 0), (0, out_pad - out_dim)))
            wb += [w.astype(jnp.bfloat16), b]
        self.wb = wb

        if emb_dim:
            assert inp_dim == 2 * emb_dim, "torch model implies inp_dim == 2*emb_dim"
            self.item_emb = jax.random.normal(keys[-2], (self.N_ITEMS, emb_dim),
                                              jnp.float32)
            self.user_emb = jax.random.normal(keys[-1], (self.N_USERS, emb_dim),
                                              jnp.float32)
        else:
            # torch model only works here if inp_dim == hidden.
            assert inp_dim == hidden, "emb_dim=0 path requires inp_dim == hidden"
            self.item_emb = None
            self.user_emb = jax.random.normal(keys[-1], (self.N_USERS, hidden),
                                              jnp.float32)

    # Embedding lookup + concat (done by XLA: only the B needed rows touched).
    def _embed(self, user, item):
        user_idx = jnp.asarray(user).reshape(-1).astype(jnp.int32)
        if self.emb_dim:
            item_idx = jnp.asarray(item).reshape(-1).astype(jnp.int32)
            item_e = jnp.take(self.item_emb, item_idx, axis=0)
            user_e = jnp.take(self.user_emb, user_idx, axis=0)
            return jnp.concatenate([item_e, user_e], axis=1)   # torch.cat order
        return jnp.take(self.user_emb, user_idx, axis=0)

    def __call__(self, user, item=None):
        x = self._embed(user, item).astype(jnp.bfloat16)       # (B, inp_dim)
        B = x.shape[0]
        # Batch tile: multiple of 16 (bf16 sublane packing), capped at 256 so
        # the M dim feeds the 256-wide MXU on v6e/v7x; B > 256 yields >= 2
        # parallel tiles (megacore sharding on v7x).
        tb = min(256, _round_up(B, 16))
        B_pad = _round_up(B, tb)
        x = jnp.pad(x, ((0, B_pad - B), (0, 0)))
        out = fused_mlp_forward(x, self.wb, tb=tb)
        return out[:B, :self.out_dim]

    def reference(self, user, item=None):
        """Pure-JAX reference mirroring the kernel math (bf16 in, f32 acc)."""
        h = self._embed(user, item)
        n_layers = len(self.wb) // 2
        for i in range(n_layers):
            w, b = self.wb[2 * i], self.wb[2 * i + 1]
            h = jnp.dot(h.astype(w.dtype), w,
                        preferred_element_type=jnp.float32) + b
            if i < n_layers - 1:
                h = jnp.maximum(h, 0.01 * h)
        return h[:, :self.out_dim]


# ---------------------------------------------------------------------------
if __name__ == "__main__":
    emb_dim = 64
    hidden = 128
    out_dim = 8
    layers = 3
    inp_dim = 2 * emb_dim            # concat of item + user embeddings

    model = NNPallas(inp_dim=inp_dim, out_dim=out_dim, hidden=hidden,
                     layers=layers, drop=0.1, emb_dim=emb_dim, seed=0)

    key = jax.random.PRNGKey(0)
    for B in (8, 300):               # single-tile, and multi-tile + padded batch
        ku, ki, key = jax.random.split(key, 3)
        user = jax.random.randint(ku, (B, 1), 0, NNPallas.N_USERS, dtype=jnp.int32)
        item = jax.random.randint(ki, (B, 1), 0, NNPallas.N_ITEMS, dtype=jnp.int32)

        out = jax.block_until_ready(model(user, item))
        assert out.shape == (B, out_dim), out.shape

        ref = model.reference(user, item)
        max_err = float(jnp.max(jnp.abs(out - ref)))
        assert jnp.allclose(out, ref, atol=1e-2, rtol=1e-2), max_err

    print("KERNEL_OK")
</pallas_src>

<mosaic_0001>
module attributes {stable_mosaic.version = 11 : i64} {
  func.func @_mlp_kernel(%arg0: i32, %arg1: memref<16x128xbf16, #tpu.memory_space<vmem>>, %arg2: memref<128x128xbf16, #tpu.memory_space<vmem>>, %arg3: memref<1x128xf32, #tpu.memory_space<vmem>>, %arg4: memref<128x128xbf16, #tpu.memory_space<vmem>>, %arg5: memref<1x128xf32, #tpu.memory_space<vmem>>, %arg6: memref<128x128xbf16, #tpu.memory_space<vmem>>, %arg7: memref<1x128xf32, #tpu.memory_space<vmem>>, %arg8: memref<16x128xf32, #tpu.memory_space<vmem>>) attributes {dimension_semantics = [#tpu.dimension_semantics<parallel>], iteration_bounds = array<i64: 1>, scalar_prefetch = 0 : i64, scratch_operands = 0 : i64, tpu.core_type = #tpu.core_type<tc>, window_params = [{transform_indices = @transform_0, window_bounds = array<i64: 16, 128>}, {pipeline_mode = #tpu.pipeline_mode<synchronous>, transform_indices = @transform_1, window_bounds = array<i64: 128, 128>}, {pipeline_mode = #tpu.pipeline_mode<synchronous>, transform_indices = @transform_2, window_bounds = array<i64: 1, 128>}, {pipeline_mode = #tpu.pipeline_mode<synchronous>, transform_indices = @transform_3, window_bounds = array<i64: 128, 128>}, {pipeline_mode = #tpu.pipeline_mode<synchronous>, transform_indices = @transform_4, window_bounds = array<i64: 1, 128>}, {pipeline_mode = #tpu.pipeline_mode<synchronous>, transform_indices = @transform_5, window_bounds = array<i64: 128, 128>}, {pipeline_mode = #tpu.pipeline_mode<synchronous>, transform_indices = @transform_6, window_bounds = array<i64: 1, 128>}, {transform_indices = @transform_7, window_bounds = array<i64: 16, 128>}]} {
    %c0 = arith.constant 0 : index
    %c0_0 = arith.constant 0 : index
    %0 = vector.load %arg1[%c0, %c0_0] : memref<16x128xbf16, #tpu.memory_space<vmem>>, vector<16x128xbf16>
    %c0_1 = arith.constant 0 : index
    %c0_2 = arith.constant 0 : index
    %1 = vector.load %arg2[%c0_1, %c0_2] : memref<128x128xbf16, #tpu.memory_space<vmem>>, vector<128x128xbf16>
    %cst = arith.constant dense<0.000000e+00> : vector<16x128xf32>
    %2 = tpu.matmul %0, %1, %cst {dimension_numbers = #tpu.dot_dimension_numbers<[1], [0], [0], [1], [0, 0, 1, 1], [], []>} : vector<16x128xbf16>, vector<128x128xbf16>, vector<16x128xf32> -> vector<16x128xf32>
    %c0_3 = arith.constant 0 : index
    %c0_4 = arith.constant 0 : index
    %3 = vector.load %arg3[%c0_3, %c0_4] : memref<1x128xf32, #tpu.memory_space<vmem>>, vector<1x128xf32>
    %4 = vector.broadcast %3 : vector<1x128xf32> to vector<16x128xf32>
    %5 = arith.addf %2, %4 : vector<16x128xf32>
    %cst_5 = arith.constant 0.00999999977 : f32
    %6 = vector.broadcast %cst_5 : f32 to vector<16x128xf32>
    %7 = arith.mulf %6, %5 : vector<16x128xf32>
    %8 = arith.maximumf %5, %7 : vector<16x128xf32>
    %9 = arith.truncf %8 : vector<16x128xf32> to vector<16x128xbf16>
    %c0_6 = arith.constant 0 : index
    %c0_7 = arith.constant 0 : index
    %10 = vector.load %arg4[%c0_6, %c0_7] : memref<128x128xbf16, #tpu.memory_space<vmem>>, vector<128x128xbf16>
    %cst_8 = arith.constant dense<0.000000e+00> : vector<16x128xf32>
    %11 = tpu.matmul %9, %10, %cst_8 {dimension_numbers = #tpu.dot_dimension_numbers<[1], [0], [0], [1], [0, 0, 1, 1], [], []>} : vector<16x128xbf16>, vector<128x128xbf16>, vector<16x128xf32> -> vector<16x128xf32>
    %c0_9 = arith.constant 0 : index
    %c0_10 = arith.constant 0 : index
    %12 = vector.load %arg5[%c0_9, %c0_10] : memref<1x128xf32, #tpu.memory_space<vmem>>, vector<1x128xf32>
    %13 = vector.broadcast %12 : vector<1x128xf32> to vector<16x128xf32>
    %14 = arith.addf %11, %13 : vector<16x128xf32>
    %cst_11 = arith.constant 0.00999999977 : f32
    %15 = vector.broadcast %cst_11 : f32 to vector<16x128xf32>
    %16 = arith.mulf %15, %14 : vector<16x128xf32>
    %17 = arith.maximumf %14, %16 : vector<16x128xf32>
    %18 = arith.truncf %17 : vector<16x128xf32> to vector<16x128xbf16>
    %c0_12 = arith.constant 0 : index
    %c0_13 = arith.constant 0 : index
    %19 = vector.load %arg6[%c0_12, %c0_13] : memref<128x128xbf16, #tpu.memory_space<vmem>>, vector<128x128xbf16>
    %cst_14 = arith.constant dense<0.000000e+00> : vector<16x128xf32>
    %20 = tpu.matmul %18, %19, %cst_14 {dimension_numbers = #tpu.dot_dimension_numbers<[1], [0], [0], [1], [0, 0, 1, 1], [], []>} : vector<16x128xbf16>, vector<128x128xbf16>, vector<16x128xf32> -> vector<16x128xf32>
    %c0_15 = arith.constant 0 : index
    %c0_16 = arith.constant 0 : index
    %21 = vector.load %arg7[%c0_15, %c0_16] : memref<1x128xf32, #tpu.memory_space<vmem>>, vector<1x128xf32>
    %22 = vector.broadcast %21 : vector<1x128xf32> to vector<16x128xf32>
    %23 = arith.addf %20, %22 : vector<16x128xf32>
    %c0_17 = arith.constant 0 : index
    %c0_18 = arith.constant 0 : index
    %24 = vector.load %arg8[%c0_17, %c0_18] : memref<16x128xf32, #tpu.memory_space<vmem>>, vector<16x128xf32>
    tpu.vector_store %arg8[%c0_17, %c0_18], %23 {strides = array<i32>} : memref<16x128xf32, #tpu.memory_space<vmem>>, vector<16x128xf32>,
    return
  }
  func.func @transform_0(%arg0: i32) -> (i32, i32) {
    %c0_i32 = arith.constant 0 : i32
    %c0_i32_0 = arith.constant 0 : i32
    return %arg0, %c0_i32 : i32, i32
  }
  func.func @transform_1(%arg0: i32) -> (i32, i32) {
    %c0_i32 = arith.constant 0 : i32
    %c0_i32_0 = arith.constant 0 : i32
    %c0_i32_1 = arith.constant 0 : i32
    return %c0_i32, %c0_i32_0 : i32, i32
  }
  func.func @transform_2(%arg0: i32) -> (i32, i32) {
    %c0_i32 = arith.constant 0 : i32
    %c0_i32_0 = arith.constant 0 : i32
    %c0_i32_1 = arith.constant 0 : i32
    return %c0_i32, %c0_i32_0 : i32, i32
  }
  func.func @transform_3(%arg0: i32) -> (i32, i32) {
    %c0_i32 = arith.constant 0 : i32
    %c0_i32_0 = arith.constant 0 : i32
    %c0_i32_1 = arith.constant 0 : i32
    return %c0_i32, %c0_i32_0 : i32, i32
  }
  func.func @transform_4(%arg0: i32) -> (i32, i32) {
    %c0_i32 = arith.constant 0 : i32
    %c0_i32_0 = arith.constant 0 : i32
    %c0_i32_1 = arith.constant 0 : i32
    return %c0_i32, %c0_i32_0 : i32, i32
  }
  func.func @transform_5(%arg0: i32) -> (i32, i32) {
    %c0_i32 = arith.constant 0 : i32
    %c0_i32_0 = arith.constant 0 : i32
    %c0_i32_1 = arith.constant 0 : i32
    return %c0_i32, %c0_i32_0 : i32, i32
  }
  func.func @transform_6(%arg0: i32) -> (i32, i32) {
    %c0_i32 = arith.constant 0 : i32
    %c0_i32_0 = arith.constant 0 : i32
    %c0_i32_1 = arith.constant 0 : i32
    return %c0_i32, %c0_i32_0 : i32, i32
  }
  func.func @transform_7(%arg0: i32) -> (i32, i32) {
    %c0_i32 = arith.constant 0 : i32
    %c0_i32_0 = arith.constant 0 : i32
    return %arg0, %c0_i32 : i32, i32
  }
}

</mosaic_0001>

<llo_original>
// kernel: tpu_custom_call.1
$region0: #{tpu_custom_call.1}
  #allocation0 [shape = 'u32[]', space=smem, size = 0x4, offset = 0x4, fixed_abs, tag = 'smem constant byte address 0x4 - core index']
  #allocation1 [shape = 'u32[144,128]{1,0:T(1,128)}', space=vmem, size = 0x12000, scoped, tag = 'internal scratch']
  %s0 = inlined_call_operand.hbm [shape: bf16[16,128], index: 0, kind: input, shape index: {}]
  %s1 = inlined_call_operand.hbm [shape: bf16[128,128], index: 1, kind: input, shape index: {}]
  %s2 = inlined_call_operand.vmem [shape: f32[1,128], index: 2, kind: input, shape index: {}]
  %s3 = inlined_call_operand.hbm [shape: bf16[128,128], index: 3, kind: input, shape index: {}]
  %s4 = inlined_call_operand.vmem [shape: f32[1,128], index: 4, kind: input, shape index: {}]
  %s5 = inlined_call_operand.hbm [shape: bf16[128,128], index: 5, kind: input, shape index: {}]
  %s6 = inlined_call_operand.vmem [shape: f32[1,128], index: 6, kind: input, shape index: {}]
  %s7 = inlined_call_operand.hbm [shape: f32[16,128], index: 7, kind: output, shape index: {}]
  %s8 = sld [smem:[#allocation0]]
  $region54: #{tpu_custom_call.1} parent=0
    _
  %s10 = ssub.s32 1, %s8
  %s11 = scalar_select 0, %s10, %s8
  $region1: #{tpu_custom_call.1} parent=0
    #allocation2 [shape = 'u8[4096]{0}', space=vmem, size = 0x1000, scoped, tag = 'input window, operand 0, single buffered']
    #allocation3 [shape = 's32[1]{0}', space=sflag, size = 0x4, scoped, tag = 'scoped memory for tpu_custom_call.1']
    #allocation4 [shape = 's32[1]{0}', space=sflag, size = 0x4, scoped, tag = 'scoped memory for tpu_custom_call.1']
    #allocation5 [shape = 'u8[32768]{0}', space=vmem, size = 0x8000, scoped, tag = 'input window, operand 1, single buffered']
    #allocation6 [shape = 's32[1]{0}', space=sflag, size = 0x4, scoped, tag = 'scoped memory for tpu_custom_call.1']
    #allocation7 [shape = 'u8[32768]{0}', space=vmem, size = 0x8000, scoped, tag = 'input window, operand 3, single buffered']
    #allocation8 [shape = 'u8[32768]{0}', space=vmem, size = 0x8000, scoped, tag = 'input window, operand 5, single buffered']
    #allocation9 [shape = 's32[1]{0}', space=sflag, size = 0x4, scoped, tag = 'scoped memory for tpu_custom_call.1']
    #allocation10 [shape = 'u8[8192]{0}', space=vmem, size = 0x2000, scoped, tag = 'output window, operand 0, single buffered']
    %12 = vsyncpa [#allocation3], 0
    %13 = vsyncpa [#allocation6], 0
    %14 = vsyncpa [#allocation9], 0
    %15 = vsyncpa [#allocation4], 0
    // Predicated region
    $region2: #{tpu_custom_call.1} parent=1 // pred_check
      _
    $region3: #{tpu_custom_call.1} parent=1 // pred_check_branch
      %17 = sbr.rel (0) target = $region5
    $region4: #{tpu_custom_call.1} parent=1 // pred_region
      %s19 = ssub.s32 128, 128
      %20 = vsyncadd [#allocation3], %s19
      %s21 = sshll.u32 [#allocation2], 4
      %s22 = int_to_ptr.vmem [resolvable:$true] %s21
      %27 = dma.hbm_to_vmem [thread:$0]  %s0, 128, %s22, [#allocation3], 64, 64, 4
    $region5: #{tpu_custom_call.1} parent=1 // pred_fallthru
      _
    // Predicated region
    $region6: #{tpu_custom_call.1} parent=1 // pred_check
      _
    $region7: #{tpu_custom_call.1} parent=1 // pred_check_branch
      %29 = sbr.rel (0) target = $region9
    $region8: #{tpu_custom_call.1} parent=1 // pred_region
      %s31 = ssub.s32 1024, 1024
      %32 = vsyncadd [#allocation6], %s31
      %s33 = sshll.u32 [#allocation5], 4
      %s34 = int_to_ptr.vmem [resolvable:$true] %s33
      %39 = dma.hbm_to_vmem [thread:$0]  %s1, 1024, %s34, [#allocation6], 64, 64, 4
    $region9: #{tpu_custom_call.1} parent=1 // pred_fallthru
      _
    // Predicated region
    $region10: #{tpu_custom_call.1} parent=1 // pred_check
      _
    $region11: #{tpu_custom_call.1} parent=1 // pred_check_branch
      %41 = sbr.rel (0) target = $region13
    $region12: #{tpu_custom_call.1} parent=1 // pred_region
      _
    $region13: #{tpu_custom_call.1} parent=1 // pred_fallthru
      _
    // Predicated region
    $region14: #{tpu_custom_call.1} parent=1 // pred_check
      _
    $region15: #{tpu_custom_call.1} parent=1 // pred_check_branch
      %43 = sbr.rel (0) target = $region17
    $region16: #{tpu_custom_call.1} parent=1 // pred_region
      %s45 = ssub.s32 1024, 1024
      %46 = vsyncadd [#allocation6], %s45
      %s47 = sshll.u32 [#allocation7], 4
      %s48 = int_to_ptr.vmem [resolvable:$true] %s47
      %53 = dma.hbm_to_vmem [thread:$0]  %s3, 1024, %s48, [#allocation6], 64, 64, 4
    $region17: #{tpu_custom_call.1} parent=1 // pred_fallthru
      _
    // Predicated region
    $region18: #{tpu_custom_call.1} parent=1 // pred_check
      _
    $region19: #{tpu_custom_call.1} parent=1 // pred_check_branch
      %55 = sbr.rel (0) target = $region21
    $region20: #{tpu_custom_call.1} parent=1 // pred_region
      _
    $region21: #{tpu_custom_call.1} parent=1 // pred_fallthru
      _
    // Predicated region
    $region22: #{tpu_custom_call.1} parent=1 // pred_check
      _
    $region23: #{tpu_custom_call.1} parent=1 // pred_check_branch
      %57 = sbr.rel (0) target = $region25
    $region24: #{tpu_custom_call.1} parent=1 // pred_region
      %s59 = ssub.s32 1024, 1024
      %60 = vsyncadd [#allocation9], %s59
      %s61 = sshll.u32 [#allocation8], 4
      %s62 = int_to_ptr.vmem [resolvable:$true] %s61
      %67 = dma.hbm_to_vmem [thread:$0]  %s5, 1024, %s62, [#allocation9], 64, 64, 4
    $region25: #{tpu_custom_call.1} parent=1 // pred_fallthru
      _
    // Predicated region
    $region26: #{tpu_custom_call.1} parent=1 // pred_check
      _
    $region27: #{tpu_custom_call.1} parent=1 // pred_check_branch
      %69 = sbr.rel (0) target = $region29
    $region28: #{tpu_custom_call.1} parent=1 // pred_region
      _
    $region29: #{tpu_custom_call.1} parent=1 // pred_fallthru
      _
    // Predicated region
    $region30: #{tpu_custom_call.1} parent=1 // pred_check
      _
    $region31: #{tpu_custom_call.1} parent=1 // pred_check_branch
      %71 = sbr.rel (0) target = $region33
    $region32: #{tpu_custom_call.1} parent=1 // pred_region
      %72 = dma.done [#allocation3], 128
    $region33: #{tpu_custom_call.1} parent=1 // pred_fallthru
      _
    // Predicated region
    $region34: #{tpu_custom_call.1} parent=1 // pred_check
      _
    $region35: #{tpu_custom_call.1} parent=1 // pred_check_branch
      %74 = sbr.rel (0) target = $region37
    $region36: #{tpu_custom_call.1} parent=1 // pred_region
      %75 = dma.done [#allocation6], 1024
    $region37: #{tpu_custom_call.1} parent=1 // pred_fallthru
      _
    // Predicated region
    $region38: #{tpu_custom_call.1} parent=1 // pred_check
      _
    $region39: #{tpu_custom_call.1} parent=1 // pred_check_branch
      %77 = sbr.rel (0) target = $region41
    $region40: #{tpu_custom_call.1} parent=1 // pred_region
      %78 = dma.done [#allocation6], 1024
    $region41: #{tpu_custom_call.1} parent=1 // pred_fallthru
      _
    // Predicated region
    $region42: #{tpu_custom_call.1} parent=1 // pred_check
      _
    $region43: #{tpu_custom_call.1} parent=1 // pred_check_branch
      %80 = sbr.rel (0) target = $region45
    $region44: #{tpu_custom_call.1} parent=1 // pred_region
      %81 = dma.done [#allocation9], 1024
    $region45: #{tpu_custom_call.1} parent=1 // pred_fallthru
      _
    %v83 = vld [vmem:[#allocation2] sm:$0xf]
    %v84 = vld [vmem:[#allocation2 + $0x4] sm:$0xf]
    %v85 = vld [vmem:[#allocation5] sm:$0xf]
    %v86 = vld [vmem:[#allocation5 + $0x4] sm:$0xf]
    %v87 = vld [vmem:[#allocation5 + $0x8] sm:$0xf]
    %v88 = vld [vmem:[#allocation5 + $0xc] sm:$0xf]
    %v89 = vld [vmem:[#allocation5 + $0x10] sm:$0xf]
    %v90 = vld [vmem:[#allocation5 + $0x14] sm:$0xf]
    %v91 = vld [vmem:[#allocation5 + $0x18] sm:$0xf]
    %v92 = vld [vmem:[#allocation5 + $0x1c] sm:$0xf]
    %v93 = vld [vmem:[#allocation5 + $0x20] sm:$0xf]
    %v94 = vld [vmem:[#allocation5 + $0x24] sm:$0xf]
    %v95 = vld [vmem:[#allocation5 + $0x28] sm:$0xf]
    %v96 = vld [vmem:[#allocation5 + $0x2c] sm:$0xf]
    %v97 = vld [vmem:[#allocation5 + $0x30] sm:$0xf]
    %v98 = vld [vmem:[#allocation5 + $0x34] sm:$0xf]
    %v99 = vld [vmem:[#allocation5 + $0x38] sm:$0xf]
    %v100 = vld [vmem:[#allocation5 + $0x3c] sm:$0xf]
    %v101 = vld [vmem:[%s2] sm:$0x1]
    %v103 = vlaneseq
    %v104 = vshrl.u32 %v103, 7
    %v105 = vsub.s32 0, %v104
    %v106 = vrot.slane %v101, %v105
    %v110 = vunpack.c.l.b16 %v83
    %v111 = vunpack.c.l.b16 %v84
    %v112 = vpack.c.b16 %v111, %v110
    %v130 = vunpack.c.l.b16 %v85
    %v131 = vunpack.c.l.b16 %v86
    %v132 = vunpack.c.l.b16 %v87
    %v133 = vunpack.c.l.b16 %v88
    %v134 = vunpack.c.l.b16 %v89
    %v135 = vunpack.c.l.b16 %v90
    %v136 = vunpack.c.l.b16 %v91
    %v137 = vunpack.c.l.b16 %v92
    %v138 = vunpack.c.l.b16 %v93
    %v139 = vunpack.c.l.b16 %v94
    %v140 = vunpack.c.l.b16 %v95
    %v141 = vunpack.c.l.b16 %v96
    %v142 = vunpack.c.l.b16 %v97
    %v143 = vunpack.c.l.b16 %v98
    %v144 = vunpack.c.l.b16 %v99
    %v145 = vunpack.c.l.b16 %v100
    %v146 = vpack.c.b16 %v131, %v130
    %v147 = vpack.c.b16 %v133, %v132
    %v148 = vpack.c.b16 %v135, %v134
    %v149 = vpack.c.b16 %v137, %v136
    %v150 = vpack.c.b16 %v139, %v138
    %v151 = vpack.c.b16 %v141, %v140
    %v152 = vpack.c.b16 %v143, %v142
    %v153 = vpack.c.b16 %v145, %v144
    %162 = vmatprep.subr.bf16.mxu0 0
    %163 = vmatpush1.bf16.msra.mxu0 %v146
    %164 = vmatprep.subr.bf16.mxu0 0
    %165 = vmatpush1.bf16.msra.mxu0 %v147
    %166 = vmatprep.subr.bf16.mxu0 0
    %167 = vmatpush1.bf16.msra.mxu0 %v148
    %168 = vmatprep.subr.bf16.mxu0 0
    %169 = vmatpush1.bf16.msra.mxu0 %v149
    %170 = vmatprep.subr.bf16.mxu0 0
    %171 = vmatpush1.bf16.msra.mxu0 %v150
    %172 = vmatprep.subr.bf16.mxu0 0
    %173 = vmatpush1.bf16.msra.mxu0 %v151
    %174 = vmatprep.subr.bf16.mxu0 0
    %175 = vmatpush1.bf16.msra.mxu0 %v152
    %176 = vmatprep.subr.bf16.mxu0 0
    %177 = vmatpush1.bf16.msra.mxu0 %v153
    %178 = vmatprep.subr.bf16.mxu0 0
    %179 = vmatpush1.bf16.msra.mxu0 0
    %180 = vmatprep.subr.bf16.mxu0 0
    %181 = vmatpush1.bf16.msra.mxu0 0
    %182 = vmatprep.subr.bf16.mxu0 0
    %183 = vmatpush1.bf16.msra.mxu0 0
    %184 = vmatprep.subr.bf16.mxu0 0
    %185 = vmatpush1.bf16.msra.mxu0 0
    %186 = vmatprep.subr.bf16.mxu0 0
    %187 = vmatpush1.bf16.msra.mxu0 0
    %188 = vmatprep.subr.bf16.mxu0 0
    %189 = vmatpush1.bf16.msra.mxu0 0
    %190 = vmatprep.subr.bf16.mxu0 0
    %191 = vmatpush1.bf16.msra.mxu0 0
    %192 = vmatprep.subr.bf16.mxu0 0
    %193 = vmatpush1.bf16.msra.mxu0 0
    %194 = vmatprep.mubr.bf16.mxu0 0
    %195 = vmatmul.mubr.bf16.gmra.mrb[0].mxu0 %v112
    %v196 = vpop.f32.mrb[0].mxu0
    %v197 = vadd.f32 %v106, %v196
    %v198 = vpop.f32.mrb[0].mxu0
    %v199 = vpop.f32.mrb[0].mxu0
    %v200 = vadd.f32 %v106, %v199
    %v201 = vpop.f32.mrb[0].mxu0
    %202 = vdwg.mxu0
    %v203 = vmul.f32 %v197, 0.01
    %v204 = vmul.f32 %v200, 0.01
    %v205 = vmax.f32 %v197, %v203
    %v206 = vmax.f32 %v200, %v204
    %v207 = vpack.c.bf16 %v206, %v205
    %v208 = vld [vmem:[#allocation7] sm:$0xf]
    %v209 = vld [vmem:[#allocation7 + $0x4] sm:$0xf]
    %v210 = vld [vmem:[#allocation7 + $0x8] sm:$0xf]
    %v211 = vld [vmem:[#allocation7 + $0xc] sm:$0xf]
    %v212 = vld [vmem:[#allocation7 + $0x10] sm:$0xf]
    %v213 = vld [vmem:[#allocation7 + $0x14] sm:$0xf]
    %v214 = vld [vmem:[#allocation7 + $0x18] sm:$0xf]
    %v215 = vld [vmem:[#allocation7 + $0x1c] sm:$0xf]
    %v216 = vld [vmem:[#allocation7 + $0x20] sm:$0xf]
    %v217 = vld [vmem:[#allocation7 + $0x24] sm:$0xf]
    %v218 = vld [vmem:[#allocation7 + $0x28] sm:$0xf]
    %v219 = vld [vmem:[#allocation7 + $0x2c] sm:$0xf]
    %v220 = vld [vmem:[#allocation7 + $0x30] sm:$0xf]
    %v221 = vld [vmem:[#allocation7 + $0x34] sm:$0xf]
    %v222 = vld [vmem:[#allocation7 + $0x38] sm:$0xf]
    %v223 = vld [vmem:[#allocation7 + $0x3c] sm:$0xf]
    %v224 = vld [vmem:[%s4] sm:$0x1]
    %v226 = vlaneseq
    %v227 = vshrl.u32 %v226, 7
    %v228 = vsub.s32 0, %v227
    %v229 = vrot.slane %v224, %v228
    %v247 = vunpack.c.l.b16 %v208
    %v248 = vunpack.c.l.b16 %v209
    %v249 = vunpack.c.l.b16 %v210
    %v250 = vunpack.c.l.b16 %v211
    %v251 = vunpack.c.l.b16 %v212
    %v252 = vunpack.c.l.b16 %v213
    %v253 = vunpack.c.l.b16 %v214
    %v254 = vunpack.c.l.b16 %v215
    %v255 = vunpack.c.l.b16 %v216
    %v256 = vunpack.c.l.b16 %v217
    %v257 = vunpack.c.l.b16 %v218
    %v258 = vunpack.c.l.b16 %v219
    %v259 = vunpack.c.l.b16 %v220
    %v260 = vunpack.c.l.b16 %v221
    %v261 = vunpack.c.l.b16 %v222
    %v262 = vunpack.c.l.b16 %v223
    %v263 = vpack.c.b16 %v248, %v247
    %v264 = vpack.c.b16 %v250, %v249
    %v265 = vpack.c.b16 %v252, %v251
    %v266 = vpack.c.b16 %v254, %v253
    %v267 = vpack.c.b16 %v256, %v255
    %v268 = vpack.c.b16 %v258, %v257
    %v269 = vpack.c.b16 %v260, %v259
    %v270 = vpack.c.b16 %v262, %v261
    %279 = vmatprep.subr.bf16.mxu0 0
    %280 = vmatpush1.bf16.msra.mxu0 %v263
    %281 = vmatprep.subr.bf16.mxu0 0
    %282 = vmatpush1.bf16.msra.mxu0 %v264
    %283 = vmatprep.subr.bf16.mxu0 0
    %284 = vmatpush1.bf16.msra.mxu0 %v265
    %285 = vmatprep.subr.bf16.mxu0 0
    %286 = vmatpush1.bf16.msra.mxu0 %v266
    %287 = vmatprep.subr.bf16.mxu0 0
    %288 = vmatpush1.bf16.msra.mxu0 %v267
    %289 = vmatprep.subr.bf16.mxu0 0
    %290 = vmatpush1.bf16.msra.mxu0 %v268
    %291 = vmatprep.subr.bf16.mxu0 0
    %292 = vmatpush1.bf16.msra.mxu0 %v269
    %293 = vmatprep.subr.bf16.mxu0 0
    %294 = vmatpush1.bf16.msra.mxu0 %v270
    %295 = vmatprep.subr.bf16.mxu0 0
    %296 = vmatpush1.bf16.msra.mxu0 0
    %297 = vmatprep.subr.bf16.mxu0 0
    %298 = vmatpush1.bf16.msra.mxu0 0
    %299 = vmatprep.subr.bf16.mxu0 0
    %300 = vmatpush1.bf16.msra.mxu0 0
    %301 = vmatprep.subr.bf16.mxu0 0
    %302 = vmatpush1.bf16.msra.mxu0 0
    %303 = vmatprep.subr.bf16.mxu0 0
    %304 = vmatpush1.bf16.msra.mxu0 0
    %305 = vmatprep.subr.bf16.mxu0 0
    %306 = vmatpush1.bf16.msra.mxu0 0
    %307 = vmatprep.subr.bf16.mxu0 0
    %308 = vmatpush1.bf16.msra.mxu0 0
    %309 = vmatprep.subr.bf16.mxu0 0
    %310 = vmatpush1.bf16.msra.mxu0 0
    %311 = vmatprep.mubr.bf16.mxu0 0
    %312 = vmatmul.mubr.bf16.gmra.mrb[0].mxu0 %v207
    %v313 = vpop.f32.mrb[0].mxu0
    %v314 = vadd.f32 %v229, %v313
    %v315 = vpop.f32.mrb[0].mxu0
    %v316 = vpop.f32.mrb[0].mxu0
    %v317 = vadd.f32 %v229, %v316
    %v318 = vpop.f32.mrb[0].mxu0
    %319 = vdwg.mxu0
    %v320 = vmul.f32 %v314, 0.01
    %v321 = vmul.f32 %v317, 0.01
    %v322 = vmax.f32 %v314, %v320
    %v323 = vmax.f32 %v317, %v321
    %v324 = vpack.c.bf16 %v323, %v322
    %v325 = vld [vmem:[#allocation8] sm:$0xf]
    %v326 = vld [vmem:[#allocation8 + $0x4] sm:$0xf]
    %v327 = vld [vmem:[#allocation8 + $0x8] sm:$0xf]
    %v328 = vld [vmem:[#allocation8 + $0xc] sm:$0xf]
    %v329 = vld [vmem:[#allocation8 + $0x10] sm:$0xf]
    %v330 = vld [vmem:[#allocation8 + $0x14] sm:$0xf]
    %v331 = vld [vmem:[#allocation8 + $0x18] sm:$0xf]
    %v332 = vld [vmem:[#allocation8 + $0x1c] sm:$0xf]
    %v333 = vld [vmem:[#allocation8 + $0x20] sm:$0xf]
    %v334 = vld [vmem:[#allocation8 + $0x24] sm:$0xf]
    %v335 = vld [vmem:[#allocation8 + $0x28] sm:$0xf]
    %v336 = vld [vmem:[#allocation8 + $0x2c] sm:$0xf]
    %v337 = vld [vmem:[#allocation8 + $0x30] sm:$0xf]
    %v338 = vld [vmem:[#allocation8 + $0x34] sm:$0xf]
    %v339 = vld [vmem:[#allocation8 + $0x38] sm:$0xf]
    %v340 = vld [vmem:[#allocation8 + $0x3c] sm:$0xf]
    %v341 = vld [vmem:[%s6] sm:$0x1]
    %v343 = vlaneseq
    %v344 = vshrl.u32 %v343, 7
    %v345 = vsub.s32 0, %v344
    %v346 = vrot.slane %v341, %v345
    %v364 = vunpack.c.l.b16 %v325
    %v365 = vunpack.c.l.b16 %v326
    %v366 = vunpack.c.l.b16 %v327
    %v367 = vunpack.c.l.b16 %v328
    %v368 = vunpack.c.l.b16 %v329
    %v369 = vunpack.c.l.b16 %v330
    %v370 = vunpack.c.l.b16 %v331
    %v371 = vunpack.c.l.b16 %v332
    %v372 = vunpack.c.l.b16 %v333
    %v373 = vunpack.c.l.b16 %v334
    %v374 = vunpack.c.l.b16 %v335
    %v375 = vunpack.c.l.b16 %v336
    %v376 = vunpack.c.l.b16 %v337
    %v377 = vunpack.c.l.b16 %v338
    %v378 = vunpack.c.l.b16 %v339
    %v379 = vunpack.c.l.b16 %v340
    %v380 = vpack.c.b16 %v365, %v364
    %v381 = vpack.c.b16 %v367, %v366
    %v382 = vpack.c.b16 %v369, %v368
    %v383 = vpack.c.b16 %v371, %v370
    %v384 = vpack.c.b16 %v373, %v372
    %v385 = vpack.c.b16 %v375, %v374
    %v386 = vpack.c.b16 %v377, %v376
    %v387 = vpack.c.b16 %v379, %v378
    %396 = vmatprep.subr.bf16.mxu0 0
    %397 = vmatpush1.bf16.msra.mxu0 %v380
    %398 = vmatprep.subr.bf16.mxu0 0
    %399 = vmatpush1.bf16.msra.mxu0 %v381
    %400 = vmatprep.subr.bf16.mxu0 0
    %401 = vmatpush1.bf16.msra.mxu0 %v382
    %402 = vmatprep.subr.bf16.mxu0 0
    %403 = vmatpush1.bf16.msra.mxu0 %v383
    %404 = vmatprep.subr.bf16.mxu0 0
    %405 = vmatpush1.bf16.msra.mxu0 %v384
    %406 = vmatprep.subr.bf16.mxu0 0
    %407 = vmatpush1.bf16.msra.mxu0 %v385
    %408 = vmatprep.subr.bf16.mxu0 0
    %409 = vmatpush1.bf16.msra.mxu0 %v386
    %410 = vmatprep.subr.bf16.mxu0 0
    %411 = vmatpush1.bf16.msra.mxu0 %v387
    %412 = vmatprep.subr.bf16.mxu0 0
    %413 = vmatpush1.bf16.msra.mxu0 0
    %414 = vmatprep.subr.bf16.mxu0 0
    %415 = vmatpush1.bf16.msra.mxu0 0
    %416 = vmatprep.subr.bf16.mxu0 0
    %417 = vmatpush1.bf16.msra.mxu0 0
    %418 = vmatprep.subr.bf16.mxu0 0
    %419 = vmatpush1.bf16.msra.mxu0 0
    %420 = vmatprep.subr.bf16.mxu0 0
    %421 = vmatpush1.bf16.msra.mxu0 0
    %422 = vmatprep.subr.bf16.mxu0 0
    %423 = vmatpush1.bf16.msra.mxu0 0
    %424 = vmatprep.subr.bf16.mxu0 0
    %425 = vmatpush1.bf16.msra.mxu0 0
    %426 = vmatprep.subr.bf16.mxu0 0
    %427 = vmatpush1.bf16.msra.mxu0 0
    %428 = vmatprep.mubr.bf16.mxu0 0
    %429 = vmatmul.mubr.bf16.gmra.mrb[0].mxu0 %v324
    %v430 = vpop.f32.mrb[0].mxu0
    %v431 = vadd.f32 %v346, %v430
    %v432 = vpop.f32.mrb[0].mxu0
    %v433 = vpop.f32.mrb[0].mxu0
    %v434 = vadd.f32 %v346, %v433
    %v435 = vpop.f32.mrb[0].mxu0
    %436 = vdwg.mxu0
    %437 = vst [vmem:[#allocation10] sm:$0xff] %v431
    %438 = vst [vmem:[#allocation10 + $0x8] sm:$0xff] %v434
    // Predicated region
    $region46: #{tpu_custom_call.1} parent=1 // pred_check
      _
    $region47: #{tpu_custom_call.1} parent=1 // pred_check_branch
      %440 = sbr.rel (0) target = $region49
    $region48: #{tpu_custom_call.1} parent=1 // pred_region
      %s442 = ssub.s32 256, 256
      %443 = vsyncadd [#allocation4], %s442
      %s444 = sshll.u32 [#allocation10], 4
      %s445 = int_to_ptr.vmem [resolvable:$true] %s444
      %450 = dma.vmem_to_hbm [thread:$0]  %s445, 256, %s7, [#allocation4], 128, 128, 8
    $region49: #{tpu_custom_call.1} parent=1 // pred_fallthru
      _
    // Predicated region
    $region50: #{tpu_custom_call.1} parent=1 // pred_check
      _
    $region51: #{tpu_custom_call.1} parent=1 // pred_check_branch
      %452 = sbr.rel (0) target = $region53
    $region52: #{tpu_custom_call.1} parent=1 // pred_region
      %453 = dma.done [#allocation4], 256
    $region53: #{tpu_custom_call.1} parent=1 // pred_fallthru
      _
    %454 = vsyncpa [#allocation3], 1
    %455 = vsyncpa [#allocation6], 1
    %456 = vsyncpa [#allocation9], 1
    %457 = vsyncpa [#allocation4], 1

</llo_original>
